<compile_context>
chip_gen: v6e
topology: v6e:2x2x1
jax: 0.10.0
libtpu: 0.0.40
codegen_flags: <defaults>
</compile_context>

<pallas_src>
import numpy as np
import jax
import jax.numpy as jnp
from jax.experimental import pallas as pl
from jax.experimental.pallas import tpu as pltpu

_EPS = 1e-12   # torch.nn.functional.normalize clamps the L2 norm at eps=1e-12


def _round_up(x, m):
    return ((x + m - 1) // m) * m


def _vmem_limit(nbytes):
    # Explicit scoped-VMEM limit: at/above the 16/32 MiB scoped defaults
    # (v5e / v6e / v7x), never above v7x's 64 MiB physical VMEM.
    return int(min(max(2 * nbytes + (1 << 20), 32 << 20), 64 << 20))


# -------------- kernel 1: fold reflections + diag(s) + Vh into (R, D) ---------

def _fold_kernel(s_ref, left_ref, right_ref, vh_ref, out_ref):
    # s_ref:    (1,  R)  singular values
    # left_ref: (L,  R)  left householder vectors
    # right_ref:(Rh, R)  right householder vectors
    # vh_ref:   (R,  D)  Vh
    # out_ref:  (R,  D)  = (Prod_left H) @ diag(s) @ (Prod_right H) @ Vh
    R = out_ref.shape[0]
    row = jax.lax.broadcasted_iota(jnp.int32, (R, R), 0)
    col = jax.lax.broadcasted_iota(jnp.int32, (R, R), 1)
    m = jnp.where(row == col, 1.0, 0.0).astype(jnp.float32)      # identity_R

    def _reflect(w, vec):
        # F.normalize(vec, p=2, dim=-1) with eps clamp, then w @ (I - 2 v v^T)
        norm = jnp.sqrt(jnp.sum(vec * vec, axis=-1, keepdims=True))
        vec = vec / jnp.maximum(norm, _EPS)
        return w - 2.0 * jnp.sum(w * vec, axis=-1, keepdims=True) * vec

    for l in range(left_ref.shape[0]):              # static unroll; L is tiny
        m = _reflect(m, left_ref[pl.ds(l, 1), :])
    m = m * s_ref[...]                              # == M @ diag(s)
    for r in range(right_ref.shape[0]):             # static unroll; Rh is tiny
        m = _reflect(m, right_ref[pl.ds(r, 1), :])

    out_ref[...] = jnp.dot(
        m, vh_ref[...], preferred_element_type=jnp.float32
    ).astype(out_ref.dtype)


def fold_projection(s_row, left, right, vh):
    R, D = vh.shape
    nbytes = 4 * (s_row.size + left.size + right.size + vh.size + R * D + R * R)
    return pl.pallas_call(
        _fold_kernel,
        out_shape=jax.ShapeDtypeStruct((R, D), jnp.float32),
        in_specs=[pl.BlockSpec(memory_space=pltpu.MemorySpace.VMEM)] * 4,
        out_specs=pl.BlockSpec(memory_space=pltpu.MemorySpace.VMEM),
        compiler_params=pltpu.CompilerParams(
            vmem_limit_bytes=_vmem_limit(nbytes)),
    )(s_row, left, right, vh)


# -------------- kernel 2: token-tiled rank->dim projection --------------------

def _embed_kernel(x_ref, wf_ref, out_ref):
    # x_ref:   (TT, R) gathered U rows for this token tile (bf16)
    # wf_ref:  (R,  D) folded projection, grid-invariant (bf16)
    # out_ref: (TT, D) f32
    out_ref[...] = jnp.dot(
        x_ref[...], wf_ref[...], preferred_element_type=jnp.float32
    ).astype(out_ref.dtype)


def embed_rows(x_gathered, w_fold, *, token_tile=256):
    T, R = x_gathered.shape
    Rw, D = w_fold.shape
    assert Rw == R

    # Token tile: up to 256 (MXU-sized on v6e/v7x), multiple of 8, and keep
    # at least 2 tiles so v7x's second TensorCore gets work.
    tt = min(token_tile, _round_up(max(T, 1), 8))
    if _round_up(T, tt) // tt < 2 and tt >= 16:
        tt = _round_up(tt // 2, 8)
    T_pad = _round_up(T, tt)
    if T_pad != T:
        x_gathered = jnp.pad(x_gathered, ((0, T_pad - T), (0, 0)))

    isz = jnp.dtype(x_gathered.dtype).itemsize
    nbytes = (2 * tt * R + 2 * R * D) * isz + 2 * tt * D * 4   # double-buffered

    out = pl.pallas_call(
        _embed_kernel,
        out_shape=jax.ShapeDtypeStruct((T_pad, D), jnp.float32),
        grid_spec=pltpu.PrefetchScalarGridSpec(
            num_scalar_prefetch=0,
            grid=(T_pad // tt,),
            in_specs=[
                pl.BlockSpec((tt, R), lambda i: (i, 0)),   # token tile of U rows
                pl.BlockSpec((Rw, D), lambda i: (0, 0)),   # folded proj (const idx)
            ],
            out_specs=pl.BlockSpec((tt, D), lambda i: (i, 0)),
        ),
        compiler_params=pltpu.CompilerParams(
            dimension_semantics=("parallel",),     # v7x dual-TC split of token tiles
            vmem_limit_bytes=_vmem_limit(nbytes)),
    )(x_gathered, w_fold)
    return out[:T]


# ----------------------------- module wrapper ---------------------------------

def house_svd_embedding_forward(indices, u, s, left, right, vh, *,
                                compute_dtype=jnp.bfloat16, token_tile=256):
    N, R = u.shape
    D = vh.shape[1]
    # One-shot (R, D) precompute — done once per forward, not per vocab row.
    w_fold = fold_projection(s.reshape(1, R), left, right, vh)          # f32
    # Clamp token ids (guards against OOB gather).
    idx = jnp.clip(indices.reshape(-1).astype(jnp.int32), 0, N - 1)
    # Dense batched row gather (cheap: R << D); feeds aligned (TT, R) tiles.
    x = jnp.take(u.astype(compute_dtype), idx, axis=0)                  # (T, R)
    out = embed_rows(x, w_fold.astype(compute_dtype), token_tile=token_tile)
    return out.reshape(*indices.shape, D)


# ----------------------------- numpy reference --------------------------------

def _reference(indices, u, s, left, right, vh):
    w = u.astype(np.float64)

    def refl(w, vec):
        vec = vec / max(np.sqrt(np.sum(vec * vec)), _EPS)
        return w - 2.0 * np.sum(w * vec, axis=-1, keepdims=True) * vec

    for l in range(left.shape[0]):
        w = refl(w, left[l].astype(np.float64))
    w = w * s.astype(np.float64)
    for r in range(right.shape[0]):
        w = refl(w, right[r].astype(np.float64))
    full = w @ vh.astype(np.float64)
    flat = full[indices.reshape(-1)]
    return flat.reshape(*indices.shape, vh.shape[1]).astype(np.float32)


if __name__ == "__main__":
    key = jax.random.PRNGKey(0)
    k_w, k_idx = jax.random.split(key)

    # nn.Embedding(num_embeddings=64, embedding_dim=32); indices (B=2, S=8)
    N, D = 64, 32
    B, S = 2, 8
    n_left, n_right = 1, 1          # HouseSvdEmbedding(left=1, right=1, sigma=True)

    # Deterministic synthetic embedding weight, then the SVD buffers from __init__.
    base_weight = (jax.random.normal(k_w, (N, D), dtype=jnp.float32) * 0.02)
    u_np, s_np, vh_np = np.linalg.svd(np.asarray(base_weight), full_matrices=False)
    Rk = s_np.shape[0]

    # left/right params: F.normalize(torch.ones_like(s), p=2, dim=-1)
    left_np = np.stack([np.ones((Rk,), np.float32) / np.float32(np.sqrt(Rk))] * n_left)
    right_np = np.stack([np.ones((Rk,), np.float32) / np.float32(np.sqrt(Rk))] * n_right)

    u = jnp.asarray(u_np, jnp.float32)
    s = jnp.asarray(s_np, jnp.float32)
    vh = jnp.asarray(vh_np, jnp.float32)
    left = jnp.asarray(left_np, jnp.float32)
    right = jnp.asarray(right_np, jnp.float32)

    indices = jax.random.randint(k_idx, (B, S), 0, N, dtype=jnp.int32)

    out = house_svd_embedding_forward(indices, u, s, left, right, vh)
    out = jax.block_until_ready(out)

    ref = _reference(np.asarray(indices), u_np.astype(np.float32),
                     s_np.astype(np.float32), left_np, right_np,
                     vh_np.astype(np.float32))
    # bf16 operands with f32 accumulation -> loosened tolerance per review.
    np.testing.assert_allclose(np.asarray(out), ref, rtol=2e-2, atol=2e-3)

    # TODO(synk): F.embedding max_norm in-place row renormalization is not
    # implemented (module default max_norm=None, so it is never exercised);
    # padding_idx / scale_grad_by_freq / sparse only affect gradients.
    print("KERNEL_OK")
</pallas_src>

<mosaic_0001>
module attributes {stable_mosaic.version = 11 : i64} {
  func.func @_fold_kernel(%arg0: memref<1x32xf32, #tpu.memory_space<vmem>>, %arg1: memref<1x32xf32, #tpu.memory_space<vmem>>, %arg2: memref<1x32xf32, #tpu.memory_space<vmem>>, %arg3: memref<32x32xf32, #tpu.memory_space<vmem>>, %arg4: memref<32x32xf32, #tpu.memory_space<vmem>>) attributes {dimension_semantics = [], scalar_prefetch = 0 : i64, scratch_operands = 0 : i64, tpu.core_type = #tpu.core_type<tc>} {
    %0 = tpu.iota {dimensions = array<i32: 0>} : vector<32x32xi32>
    %1 = tpu.iota {dimensions = array<i32: 1>} : vector<32x32xi32>
    %2 = arith.cmpi eq, %0, %1 : vector<32x32xi32>
    %cst = arith.constant 1.000000e+00 : f32
    %cst_0 = arith.constant 0.000000e+00 : f32
    %3 = vector.broadcast %cst : f32 to vector<32x32xf32>
    %4 = vector.broadcast %cst_0 : f32 to vector<32x32xf32>
    %5 = arith.select %2, %3, %4 : vector<32x32xi1>, vector<32x32xf32>
    %c0 = arith.constant 0 : index
    %c0_1 = arith.constant 0 : index
    %6 = vector.load %arg1[%c0, %c0_1] : memref<1x32xf32, #tpu.memory_space<vmem>>, vector<1x32xf32>
    %7 = arith.mulf %6, %6 : vector<1x32xf32>
    %cst_2 = arith.constant dense<0.000000e+00> : vector<1xf32>
    %8 = vector.multi_reduction <add>, %7, %cst_2 [1] : vector<1x32xf32> to vector<1xf32>
    %9 = vector.shape_cast %8 : vector<1xf32> to vector<1x1xf32>
    %10 = math.sqrt %9 : vector<1x1xf32>
    %cst_3 = arith.constant 9.99999996E-13 : f32
    %11 = vector.broadcast %cst_3 : f32 to vector<1x1xf32>
    %12 = arith.maximumf %10, %11 : vector<1x1xf32>
    %13 = vector.broadcast %12 : vector<1x1xf32> to vector<1x32xf32>
    %14 = arith.divf %6, %13 : vector<1x32xf32>
    %15 = vector.broadcast %14 : vector<1x32xf32> to vector<32x32xf32>
    %16 = arith.mulf %5, %15 : vector<32x32xf32>
    %cst_4 = arith.constant dense<0.000000e+00> : vector<32xf32>
    %17 = vector.multi_reduction <add>, %16, %cst_4 [1] : vector<32x32xf32> to vector<32xf32>
    %18 = vector.shape_cast %17 : vector<32xf32> to vector<32x1xf32>
    %cst_5 = arith.constant 2.000000e+00 : f32
    %19 = vector.broadcast %cst_5 : f32 to vector<32x1xf32>
    %20 = arith.mulf %19, %18 : vector<32x1xf32>
    %21 = vector.broadcast %20 : vector<32x1xf32> to vector<32x32xf32>
    %22 = vector.broadcast %14 : vector<1x32xf32> to vector<32x32xf32>
    %23 = arith.mulf %21, %22 : vector<32x32xf32>
    %24 = arith.subf %5, %23 : vector<32x32xf32>
    %c0_6 = arith.constant 0 : index
    %c0_7 = arith.constant 0 : index
    %25 = vector.load %arg0[%c0_6, %c0_7] : memref<1x32xf32, #tpu.memory_space<vmem>>, vector<1x32xf32>
    %26 = vector.broadcast %25 : vector<1x32xf32> to vector<32x32xf32>
    %27 = arith.mulf %24, %26 : vector<32x32xf32>
    %c0_8 = arith.constant 0 : index
    %c0_9 = arith.constant 0 : index
    %28 = vector.load %arg2[%c0_8, %c0_9] : memref<1x32xf32, #tpu.memory_space<vmem>>, vector<1x32xf32>
    %29 = arith.mulf %28, %28 : vector<1x32xf32>
    %cst_10 = arith.constant dense<0.000000e+00> : vector<1xf32>
    %30 = vector.multi_reduction <add>, %29, %cst_10 [1] : vector<1x32xf32> to vector<1xf32>
    %31 = vector.shape_cast %30 : vector<1xf32> to vector<1x1xf32>
    %32 = math.sqrt %31 : vector<1x1xf32>
    %cst_11 = arith.constant 9.99999996E-13 : f32
    %33 = vector.broadcast %cst_11 : f32 to vector<1x1xf32>
    %34 = arith.maximumf %32, %33 : vector<1x1xf32>
    %35 = vector.broadcast %34 : vector<1x1xf32> to vector<1x32xf32>
    %36 = arith.divf %28, %35 : vector<1x32xf32>
    %37 = vector.broadcast %36 : vector<1x32xf32> to vector<32x32xf32>
    %38 = arith.mulf %27, %37 : vector<32x32xf32>
    %cst_12 = arith.constant dense<0.000000e+00> : vector<32xf32>
    %39 = vector.multi_reduction <add>, %38, %cst_12 [1] : vector<32x32xf32> to vector<32xf32>
    %40 = vector.shape_cast %39 : vector<32xf32> to vector<32x1xf32>
    %cst_13 = arith.constant 2.000000e+00 : f32
    %41 = vector.broadcast %cst_13 : f32 to vector<32x1xf32>
    %42 = arith.mulf %41, %40 : vector<32x1xf32>
    %43 = vector.broadcast %42 : vector<32x1xf32> to vector<32x32xf32>
    %44 = vector.broadcast %36 : vector<1x32xf32> to vector<32x32xf32>
    %45 = arith.mulf %43, %44 : vector<32x32xf32>
    %46 = arith.subf %27, %45 : vector<32x32xf32>
    %c0_14 = arith.constant 0 : index
    %c0_15 = arith.constant 0 : index
    %47 = vector.load %arg3[%c0_14, %c0_15] : memref<32x32xf32, #tpu.memory_space<vmem>>, vector<32x32xf32>
    %cst_16 = arith.constant dense<0.000000e+00> : vector<32x32xf32>
    %48 = tpu.matmul %46, %47, %cst_16 {dimension_numbers = #tpu.dot_dimension_numbers<[1], [0], [0], [1], [0, 0, 1, 1], [], []>} : vector<32x32xf32>, vector<32x32xf32>, vector<32x32xf32> -> vector<32x32xf32>
    %c0_17 = arith.constant 0 : index
    %c0_18 = arith.constant 0 : index
    %49 = vector.load %arg4[%c0_17, %c0_18] : memref<32x32xf32, #tpu.memory_space<vmem>>, vector<32x32xf32>
    tpu.vector_store %arg4[%c0_17, %c0_18], %48 {strides = array<i32>} : memref<32x32xf32, #tpu.memory_space<vmem>>, vector<32x32xf32>,
    return
  }
}

</mosaic_0001>

<llo_original>
// kernel: tpu_custom_call.1
$region0: #{tpu_custom_call.1}
  #allocation0 [shape = 'u32[]', space=smem, size = 0x4, offset = 0x4, fixed_abs, tag = 'smem constant byte address 0x4 - core index']
  #allocation1 [shape = 'u32[144,128]{1,0:T(1,128)}', space=vmem, size = 0x12000, scoped, tag = 'internal scratch']
  %s0 = inlined_call_operand.hbm [shape: f32[1,32], index: 0, kind: input, shape index: {}]
  %s1 = inlined_call_operand.vmem [shape: f32[1,32], index: 1, kind: input, shape index: {}]
  %s2 = inlined_call_operand.vmem [shape: f32[1,32], index: 2, kind: input, shape index: {}]
  %s3 = inlined_call_operand.hbm [shape: f32[32,32], index: 3, kind: input, shape index: {}]
  %s4 = inlined_call_operand.hbm [shape: f32[32,32], index: 4, kind: output, shape index: {}]
  %s5 = sld [smem:[#allocation0]]
  $region34: #{tpu_custom_call.1} parent=0
    _
  %s7 = ssub.s32 1, %s5
  %s8 = scalar_select 0, %s7, %s5
  $region1: #{tpu_custom_call.1} parent=0
    #allocation2 [shape = 'u8[512]{0}', space=vmem, size = 0x400, scoped, tag = 'input window, operand 0, single buffered']
    #allocation3 [shape = 's32[1]{0}', space=sflag, size = 0x4, scoped, tag = 'scoped memory for tpu_custom_call.1']
    #allocation4 [shape = 's32[1]{0}', space=sflag, size = 0x4, scoped, tag = 'scoped memory for tpu_custom_call.1']
    #allocation5 [shape = 'u8[16384]{0}', space=vmem, size = 0x4000, scoped, tag = 'input window, operand 3, single buffered']
    #allocation6 [shape = 's32[1]{0}', space=sflag, size = 0x4, scoped, tag = 'scoped memory for tpu_custom_call.1']
    #allocation7 [shape = 'u8[16384]{0}', space=vmem, size = 0x4000, scoped, tag = 'output window, operand 0, single buffered']
    %9 = vsyncpa [#allocation3], 0
    %10 = vsyncpa [#allocation6], 0
    %11 = vsyncpa [#allocation4], 0
    // Predicated region
    $region2: #{tpu_custom_call.1} parent=1 // pred_check
      _
    $region3: #{tpu_custom_call.1} parent=1 // pred_check_branch
      %13 = sbr.rel (0) target = $region5
    $region4: #{tpu_custom_call.1} parent=1 // pred_region
      %s15 = ssub.s32 16, 16
      %16 = vsyncadd [#allocation3], %s15
      %s18 = sshll.u32 [#allocation2], 4
      %s19 = int_to_ptr.vmem [resolvable:$true] %s18
      %21 = dma.hbm_to_vmem [thread:$0]  %s0, 16, %s19, [#allocation3]
    $region5: #{tpu_custom_call.1} parent=1 // pred_fallthru
      _
    // Predicated region
    $region6: #{tpu_custom_call.1} parent=1 // pred_check
      _
    $region7: #{tpu_custom_call.1} parent=1 // pred_check_branch
      %23 = sbr.rel (0) target = $region9
    $region8: #{tpu_custom_call.1} parent=1 // pred_region
      _
    $region9: #{tpu_custom_call.1} parent=1 // pred_fallthru
      _
    // Predicated region
    $region10: #{tpu_custom_call.1} parent=1 // pred_check
      _
    $region11: #{tpu_custom_call.1} parent=1 // pred_check_branch
      %25 = sbr.rel (0) target = $region13
    $region12: #{tpu_custom_call.1} parent=1 // pred_region
      _
    $region13: #{tpu_custom_call.1} parent=1 // pred_fallthru
      _
    // Predicated region
    $region14: #{tpu_custom_call.1} parent=1 // pred_check
      _
    $region15: #{tpu_custom_call.1} parent=1 // pred_check_branch
      %27 = sbr.rel (0) target = $region17
    $region16: #{tpu_custom_call.1} parent=1 // pred_region
      %s29 = ssub.s32 512, 512
      %30 = vsyncadd [#allocation6], %s29
      %s31 = sshll.u32 [#allocation5], 4
      %s32 = int_to_ptr.vmem [resolvable:$true] %s31
      %37 = dma.hbm_to_vmem [thread:$0]  %s3, 512, %s32, [#allocation6], 128, 128, 8
    $region17: #{tpu_custom_call.1} parent=1 // pred_fallthru
      _
    // Predicated region
    $region18: #{tpu_custom_call.1} parent=1 // pred_check
      _
    $region19: #{tpu_custom_call.1} parent=1 // pred_check_branch
      %39 = sbr.rel (0) target = $region21
    $region20: #{tpu_custom_call.1} parent=1 // pred_region
      %40 = dma.done [#allocation3], 16
    $region21: #{tpu_custom_call.1} parent=1 // pred_fallthru
      _
    // Predicated region
    $region22: #{tpu_custom_call.1} parent=1 // pred_check
      _
    $region23: #{tpu_custom_call.1} parent=1 // pred_check_branch
      %42 = sbr.rel (0) target = $region25
    $region24: #{tpu_custom_call.1} parent=1 // pred_region
      %43 = dma.done [#allocation6], 512
    $region25: #{tpu_custom_call.1} parent=1 // pred_fallthru
      _
    %v44 = vlaneseq
    %v45 = vshrl.u32 %v44, 7
    %v46 = vadd.s32 %v45, 8
    %v47 = vadd.s32 %v45, 16
    %v48 = vadd.s32 %v45, 24
    %v49 = vlaneseq
    %v50 = vand.u32 %v49, 127
    %vm51 = vcmp.eq.s32.totalorder %v45, %v50
    %vm52 = vcmp.eq.s32.totalorder %v46, %v50
    %vm53 = vcmp.eq.s32.totalorder %v47, %v50
    %vm54 = vcmp.eq.s32.totalorder %v48, %v50
    %v55 = vsel %vm51, 1.0, 0.0
    %v56 = vsel %vm52, 1.0, 0.0
    %v57 = vsel %vm53, 1.0, 0.0
    %v58 = vsel %vm54, 1.0, 0.0
    %v59 = vld [vmem:[%s1] sm:$0x1]
    %v60 = vmul.f32 %v59, %v59
    %vm61 = vcmask 253952
    %v62 = vsel %vm61, %v60, 0.0
    %63 = vadd.xlane.f32.xlu0 %v62
    %v64 = vpop.xlane.xlu0 %63
    %v65 = vrsqrt.pop %v64
    %v66 = vmul.f32 %v64, %v65
    %vm67 = vcmp.eq.f32.partialorder %v64, inf
    %v68 = vsel %vm67, %v64, %v66
    %vm69 = vcmp.eq.f32.partialorder %v64, 0.0
    %v70 = vand.u32 %v64, 2147483648
    %v71 = vsel %vm69, %v70, %v68
    %v72 = vmax.f32 %v71, 1e-12
    %v73 = vrcp.pop %v72
    %v74 = vmul.f32 %v59, %v73
    %v76 = vlaneseq
    %v77 = vshrl.u32 %v76, 7
    %v78 = vsub.s32 0, %v77
    %v79 = vrot.slane %v74, %v78
    %v81 = vmul.f32 %v55, %v79
    %v82 = vmul.f32 %v56, %v79
    %v83 = vmul.f32 %v57, %v79
    %v84 = vmul.f32 %v58, %v79
    %vm85 = vcmask 261120
    %v86 = vsel %vm85, %v81, 0.0
    %87 = vadd.xlane.f32.xlu0 %v86
    %v88 = vpop.xlane.xlu0 %87
    %v89 = vsel %vm85, %v82, 0.0
    %90 = vadd.xlane.f32.xlu0 %v89
    %v91 = vpop.xlane.xlu0 %90
    %v92 = vsel %vm85, %v83, 0.0
    %93 = vadd.xlane.f32.xlu0 %v92
    %v94 = vpop.xlane.xlu0 %93
    %v95 = vsel %vm85, %v84, 0.0
    %96 = vadd.xlane.f32.xlu0 %v95
    %v97 = vpop.xlane.xlu0 %96
    %v98 = vmul.f32 %v88, 2.0
    %v99 = vmul.f32 %v91, 2.0
    %v100 = vmul.f32 %v94, 2.0
    %v101 = vmul.f32 %v97, 2.0
    %v102 = vmul.f32 %v98, %v79
    %v103 = vmul.f32 %v99, %v79
    %v104 = vmul.f32 %v100, %v79
    %v105 = vmul.f32 %v101, %v79
    %v106 = vsub.f32 %v55, %v102
    %v107 = vsub.f32 %v56, %v103
    %v108 = vsub.f32 %v57, %v104
    %v109 = vsub.f32 %v58, %v105
    %v110 = vld [vmem:[#allocation2] sm:$0x1]
    %v112 = vlaneseq
    %v113 = vshrl.u32 %v112, 7
    %v114 = vsub.s32 0, %v113
    %v115 = vrot.slane %v110, %v114
    %v117 = vmul.f32 %v106, %v115
    %v118 = vmul.f32 %v107, %v115
    %v119 = vmul.f32 %v108, %v115
    %v120 = vmul.f32 %v109, %v115
    %v121 = vld [vmem:[%s2] sm:$0x1]
    %v122 = vmul.f32 %v121, %v121
    %v123 = vsel %vm61, %v122, 0.0
    %124 = vadd.xlane.f32.xlu0 %v123
    %v125 = vpop.xlane.xlu0 %124
    %v126 = vrsqrt.pop %v125
    %v127 = vmul.f32 %v125, %v126
    %vm128 = vcmp.eq.f32.partialorder %v125, inf
    %v129 = vsel %vm128, %v125, %v127
    %vm130 = vcmp.eq.f32.partialorder %v125, 0.0
    %v131 = vand.u32 %v125, 2147483648
    %v132 = vsel %vm130, %v131, %v129
    %v133 = vmax.f32 %v132, 1e-12
    %v134 = vrcp.pop %v133
    %v135 = vmul.f32 %v121, %v134
    %v137 = vlaneseq
    %v138 = vshrl.u32 %v137, 7
    %v139 = vsub.s32 0, %v138
    %v140 = vrot.slane %v135, %v139
    %v142 = vmul.f32 %v117, %v140
    %v143 = vmul.f32 %v118, %v140
    %v144 = vmul.f32 %v119, %v140
    %v145 = vmul.f32 %v120, %v140
    %v146 = vsel %vm85, %v142, 0.0
    %147 = vadd.xlane.f32.xlu0 %v146
    %v148 = vpop.xlane.xlu0 %147
    %v149 = vsel %vm85, %v143, 0.0
    %150 = vadd.xlane.f32.xlu0 %v149
    %v151 = vpop.xlane.xlu0 %150
    %v152 = vsel %vm85, %v144, 0.0
    %153 = vadd.xlane.f32.xlu0 %v152
    %v154 = vpop.xlane.xlu0 %153
    %v155 = vsel %vm85, %v145, 0.0
    %156 = vadd.xlane.f32.xlu0 %v155
    %v157 = vpop.xlane.xlu0 %156
    %v158 = vmul.f32 %v148, 2.0
    %v159 = vmul.f32 %v151, 2.0
    %v160 = vmul.f32 %v154, 2.0
    %v161 = vmul.f32 %v157, 2.0
    %v162 = vmul.f32 %v158, %v140
    %v163 = vmul.f32 %v159, %v140
    %v164 = vmul.f32 %v160, %v140
    %v165 = vmul.f32 %v161, %v140
    %v166 = vsub.f32 %v117, %v162
    %v167 = vsub.f32 %v118, %v163
    %v168 = vsub.f32 %v119, %v164
    %v169 = vsub.f32 %v120, %v165
    %v170 = vld [vmem:[#allocation5] sm:$0xff]
    %v171 = vld [vmem:[#allocation5 + $0x8] sm:$0xff]
    %v172 = vld [vmem:[#allocation5 + $0x10] sm:$0xff]
    %v173 = vld [vmem:[#allocation5 + $0x18] sm:$0xff]
    %v175 = vsel %vm85, %v166, 0
    %v178 = vsel %vm85, %v167, 0
    %v181 = vsel %vm85, %v168, 0
    %v184 = vsel %vm85, %v169, 0
    %186 = vmatprep.subr.mxu0 0.0
    %187 = vmatpush1.msra.mxu0 0.0
    %188 = vmatprep.subr.mxu0 0.0
    %189 = vmatpush1.msra.mxu0 0.0
    %190 = vmatprep.subr.mxu0 0.0
    %191 = vmatpush1.msra.mxu0 0.0
    %192 = vmatprep.subr.mxu0 0.0
    %193 = vmatpush1.msra.mxu0 0.0
    %194 = vmatprep.subr.mxu0 0.0
    %195 = vmatpush1.msra.mxu0 0.0
    %196 = vmatprep.subr.mxu0 0.0
    %197 = vmatpush1.msra.mxu0 0.0
    %198 = vmatprep.subr.mxu0 0.0
    %199 = vmatpush1.msra.mxu0 0.0
    %200 = vmatprep.subr.mxu0 0.0
    %201 = vmatpush1.msra.mxu0 0.0
    %202 = vmatprep.subr.mxu0 0.0
    %203 = vmatpush1.msra.mxu0 0.0
    %204 = vmatprep.subr.mxu0 0.0
    %205 = vmatpush1.msra.mxu0 0.0
    %206 = vmatprep.subr.mxu0 0.0
    %207 = vmatpush1.msra.mxu0 0.0
    %208 = vmatprep.subr.mxu0 0.0
    %209 = vmatpush1.msra.mxu0 0.0
    %210 = vmatprep.subr.mxu0 0.0
    %211 = vmatpush1.msra.mxu0 %v173
    %212 = vmatprep.subr.mxu0 0.0
    %213 = vmatpush1.msra.mxu0 %v172
    %214 = vmatprep.subr.mxu0 0.0
    %215 = vmatpush1.msra.mxu0 %v171
    %216 = vmatprep.subr.mxu0 0.0
    %217 = vmatpush1.msra.mxu0 %v170
    %218 = vmatprep.subr.mxu0 0.0
    %219 = vmatpush2.msra.mxu0 0.0
    %220 = vmatprep.subr.mxu0 0.0
    %221 = vmatpush2.msra.mxu0 0.0
    %222 = vmatprep.subr.mxu0 0.0
    %223 = vmatpush2.msra.mxu0 0.0
    %224 = vmatprep.subr.mxu0 0.0
    %225 = vmatpush2.msra.mxu0 0.0
    %226 = vmatprep.subr.mxu0 0.0
    %227 = vmatpush2.msra.mxu0 0.0
    %228 = vmatprep.subr.mxu0 0.0
    %229 = vmatpush2.msra.mxu0 0.0
    %230 = vmatprep.subr.mxu0 0.0
    %231 = vmatpush2.msra.mxu0 0.0
    %232 = vmatprep.subr.mxu0 0.0
    %233 = vmatpush2.msra.mxu0 0.0
    %234 = vmatprep.subr.mxu0 0.0
    %235 = vmatpush2.msra.mxu0 0.0
    %236 = vmatprep.subr.mxu0 0.0
    %237 = vmatpush2.msra.mxu0 0.0
    %238 = vmatprep.subr.mxu0 0.0
    %239 = vmatpush2.msra.mxu0 0.0
    %240 = vmatprep.subr.mxu0 0.0
    %241 = vmatpush2.msra.mxu0 0.0
    %242 = vmatprep.subr.mxu0 0.0
    %243 = vmatpush2.msra.mxu0 0.0
    %244 = vmatprep.subr.mxu0 0.0
    %245 = vmatpush2.msra.mxu0 0.0
    %246 = vmatprep.subr.mxu0 0.0
    %247 = vmatpush2.msra.mxu0 0.0
    %248 = vmatprep.subr.mxu0 0.0
    %249 = vmatpush2.msra.mxu0 0.0
    %250 = vmatprep.mubr.f32.mxu0 0.0
    %251 = vmatmul.mubr.f32.gmra.mxu0 %v175
    %v252 = vpop.f32.mrf.mxu0
    %v253 = vadd.f32 0.0, %v252
    %v254 = vpop.f32.mrf.mxu0
    %255 = vmatprep.mubr.f32.mxu0 0.0
    %256 = vmatmul.mubr.f32.gmra.mxu0 %v178
    %v257 = vpop.f32.mrf.mxu0
    %v258 = vadd.f32 0.0, %v257
    %v259 = vpop.f32.mrf.mxu0
    %260 = vmatprep.mubr.f32.mxu0 0.0
    %261 = vmatmul.mubr.f32.gmra.mxu0 %v181
    %v262 = vpop.f32.mrf.mxu0
    %v263 = vadd.f32 0.0, %v262
    %v264 = vpop.f32.mrf.mxu0
    %265 = vmatprep.mubr.f32.mxu0 0.0
    %266 = vmatmul.mubr.f32.gmra.mxu0 %v184
    %v267 = vpop.f32.mrf.mxu0
    %v268 = vadd.f32 0.0, %v267
    %v269 = vpop.f32.mrf.mxu0
    %270 = vdwg.mxu0
    %271 = vst.msk [vmem:[#allocation7] sm:$0xff] %vm85, %v253
    %272 = vst.msk [vmem:[#allocation7 + $0x8] sm:$0xff] %vm85, %v258
    %273 = vst.msk [vmem:[#allocation7 + $0x10] sm:$0xff] %vm85, %v263
    %274 = vst.msk [vmem:[#allocation7 + $0x18] sm:$0xff] %vm85, %v268
    // Predicated region
    $region26: #{tpu_custom_call.1} parent=1 // pred_check
      _
    $region27: #{tpu_custom_call.1} parent=1 // pred_check_branch
      %276 = sbr.rel (0) target = $region29
    $region28: #{tpu_custom_call.1} parent=1 // pred_region
      %s278 = ssub.s32 512, 512
      %279 = vsyncadd [#allocation4], %s278
      %s280 = sshll.u32 [#allocation7], 4
      %s281 = int_to_ptr.vmem [resolvable:$true] %s280
      %286 = dma.vmem_to_hbm [thread:$0]  %s281, 512, %s4, [#allocation4], 128, 128, 8
    $region29: #{tpu_custom_call.1} parent=1 // pred_fallthru
      _
    // Predicated region
    $region30: #{tpu_custom_call.1} parent=1 // pred_check
      _
    $region31: #{tpu_custom_call.1} parent=1 // pred_check_branch
      %288 = sbr.rel (0) target = $region33
    $region32: #{tpu_custom_call.1} parent=1 // pred_region
      %289 = dma.done [#allocation4], 512
    $region33: #{tpu_custom_call.1} parent=1 // pred_fallthru
      _
    %290 = vsyncpa [#allocation3], 1
    %291 = vsyncpa [#allocation6], 1
    %292 = vsyncpa [#allocation4], 1

</llo_original>
